<compile_context>
chip_gen: v7x
topology: tpu7x:2x2x1
jax: 0.10.0
libtpu: 0.0.40
codegen_flags: <defaults>
</compile_context>

<pallas_src>
import jax
import jax.numpy as jnp
from jax.experimental import pallas as pl
from jax.experimental.pallas import tpu as pltpu


def rnn_seq_kernel(x_ref, h0_ref, wt_ref, ut_ref, b_ref, wo_ref,
                   out_ref, hfin_ref, h_scr):
    """One grid step == one timestep of the recurrence."""
    t = pl.program_id(0)

    # Load the initial hidden state into the carry scratch at t == 0.
    @pl.when(t == 0)
    def _():
        h_scr[...] = h0_ref[...].astype(jnp.float32)

    h = h_scr[...]                                            # [B, H] f32

    # Pre-activation: x_t @ W.T + h @ U.T + b, f32 accumulation on the MXU.
    pre = (
        jnp.dot(x_ref[...], wt_ref[...], preferred_element_type=jnp.float32)
        + jnp.dot(h, ut_ref[...], preferred_element_type=jnp.float32)
        + b_ref[...]
    )
    new_h = jnp.maximum(pre, 0.0)                             # ReLU on the VPU
    h_scr[...] = new_h                                        # carry to t + 1

    # out_t = new_h @ Wo, with Wo as a [1, H] row: VPU mul + XLU lane-reduce
    # (keeps the MXU free; an N=1 matmul would waste almost all MXU lanes).
    out_ref[...] = jnp.sum(new_h * wo_ref[...], axis=-1,
                           keepdims=True).astype(out_ref.dtype)

    # Final-hidden writeback; the output block is resident across the grid so
    # the HBM store happens once, at the end.
    @pl.when(t == pl.num_programs(0) - 1)
    def _():
        hfin_ref[...] = new_h.astype(hfin_ref.dtype)


def rnn_forward_sequence(xs, hidden, W, Wo, U, b):
    """Run the RNNCell over a whole sequence in ONE pallas_call.

    xs: [T, B, I], hidden: [B, H], W: [H, I], Wo: [H, 1], U: [H, H], b: [H].
    Returns (out_seq [T, B, 1], hidden_final [B, H]).
    """
    T, B, I = xs.shape
    H = hidden.shape[1]
    dtype = xs.dtype

    # One-time (per sequence) parameter prep, amortized over all T steps.
    Wt = W.T                     # [I, H]
    Ut = U.T                     # [H, H]
    b2 = b.reshape(1, H)         # [1, H] (broadcast over batch)
    wo_row = Wo.reshape(1, H)    # [1, H] (row form of the [H, 1] column)

    grid_spec = pltpu.PrefetchScalarGridSpec(
        num_scalar_prefetch=0,
        grid=(T,),
        in_specs=[
            pl.BlockSpec((None, B, I), lambda t: (t, 0, 0)),  # x_t streamed
            pl.BlockSpec((B, H), lambda t: (0, 0)),           # h0 (read @ t=0)
            pl.BlockSpec((I, H), lambda t: (0, 0)),           # Wt resident
            pl.BlockSpec((H, H), lambda t: (0, 0)),           # Ut resident
            pl.BlockSpec((1, H), lambda t: (0, 0)),           # b  resident
            pl.BlockSpec((1, H), lambda t: (0, 0)),           # Wo resident
        ],
        out_specs=[
            pl.BlockSpec((None, B, 1), lambda t: (t, 0, 0)),  # out_t
            pl.BlockSpec((B, H), lambda t: (0, 0)),           # final hidden
        ],
        scratch_shapes=[pltpu.VMEM((B, H), jnp.float32)],     # hidden carry
    )

    out_seq, hidden_final = pl.pallas_call(
        rnn_seq_kernel,
        out_shape=(
            jax.ShapeDtypeStruct((T, B, 1), dtype),
            jax.ShapeDtypeStruct((B, H), dtype),
        ),
        grid_spec=grid_spec,
        input_output_aliases={1: 1},   # hidden-in aliases hidden-out
        compiler_params=pltpu.CompilerParams(
            dimension_semantics=("arbitrary",),  # sequential recurrence axis
        ),
    )(xs, hidden, Wt, Ut, b2, wo_row)
    return out_seq, hidden_final


def rnn_cell_forward(x, hidden, W, Wo, U, b):
    """Single RNNCell step — exact semantics of the PyTorch module forward."""
    out_seq, hidden_new = rnn_forward_sequence(x[None], hidden, W, Wo, U, b)
    return out_seq[0], hidden_new


if __name__ == "__main__":
    # Small shapes consistent with the module: batch=8, input=16, hidden=32,
    # plus a short sequence (T=8) to exercise the in-kernel recurrence loop.
    B, I, H, T = 8, 16, 32, 8
    key = jax.random.PRNGKey(0)
    kx, kh, kw, kwo, ku, kb = jax.random.split(key, 6)

    xs = jax.random.normal(kx, (T, B, I), dtype=jnp.float32)
    hidden = jax.random.normal(kh, (B, H), dtype=jnp.float32)

    # Deterministic parameter init (module __init__ gives shapes only).
    W = jax.random.normal(kw, (H, I), dtype=jnp.float32) * 0.1
    Wo = jax.random.normal(kwo, (H, 1), dtype=jnp.float32) * 0.1
    U = jax.random.normal(ku, (H, H), dtype=jnp.float32) * 0.1
    b = jax.random.normal(kb, (H,), dtype=jnp.float32) * 0.1

    # Pure-JAX references (computed before the kernel runs).
    def ref_step(h, x_t):
        h_new = jnp.maximum(x_t @ W.T + h @ U.T + b, 0.0)
        return h_new, h_new @ Wo

    ref_h1 = jnp.maximum(xs[0] @ W.T + hidden @ U.T + b, 0.0)
    ref_out1 = ref_h1 @ Wo
    ref_hT, ref_outs = jax.lax.scan(ref_step, hidden, xs)

    # 1) Single step (module-faithful API), T=1 special case of the kernel.
    out1, h1 = jax.jit(rnn_cell_forward)(xs[0], hidden, W, Wo, U, b)
    jax.block_until_ready((out1, h1))
    assert out1.shape == (B, 1) and h1.shape == (B, H)
    assert jnp.allclose(h1, ref_h1, atol=1e-5, rtol=1e-5)
    assert jnp.allclose(out1, ref_out1, atol=1e-5, rtol=1e-5)

    # 2) Whole sequence in one kernel launch (the performance-relevant path).
    out_seq, hT = jax.jit(rnn_forward_sequence)(xs, hidden, W, Wo, U, b)
    jax.block_until_ready((out_seq, hT))
    assert out_seq.shape == (T, B, 1) and hT.shape == (B, H)
    assert jnp.allclose(hT, ref_hT, atol=1e-5, rtol=1e-5)
    assert jnp.allclose(out_seq, ref_outs, atol=1e-5, rtol=1e-5)

    print("KERNEL_OK")
</pallas_src>

<mosaic_0001>
module attributes {stable_mosaic.version = 11 : i64} {
  func.func @rnn_seq_kernel(%arg0: i32, %arg1: memref<1x8x16xf32, #tpu.memory_space<vmem>>, %arg2: memref<8x32xf32, #tpu.memory_space<vmem>>, %arg3: memref<16x32xf32, #tpu.memory_space<vmem>>, %arg4: memref<32x32xf32, #tpu.memory_space<vmem>>, %arg5: memref<1x32xf32, #tpu.memory_space<vmem>>, %arg6: memref<1x32xf32, #tpu.memory_space<vmem>>, %arg7: memref<1x8x1xf32, #tpu.memory_space<vmem>>, %arg8: memref<8x32xf32, #tpu.memory_space<vmem>>, %arg9: memref<8x32xf32, #tpu.memory_space<vmem>>) attributes {dimension_semantics = [#tpu.dimension_semantics<arbitrary>], iteration_bounds = array<i64: 1>, scalar_prefetch = 0 : i64, scratch_operands = 1 : i64, tpu.core_type = #tpu.core_type<tc>, window_params = [{transform_indices = @transform_0, window_bounds = array<i64: 1, 8, 16>}, {pipeline_mode = #tpu.pipeline_mode<synchronous>, transform_indices = @transform_1, window_bounds = array<i64: 8, 32>}, {pipeline_mode = #tpu.pipeline_mode<synchronous>, transform_indices = @transform_2, window_bounds = array<i64: 16, 32>}, {pipeline_mode = #tpu.pipeline_mode<synchronous>, transform_indices = @transform_3, window_bounds = array<i64: 32, 32>}, {pipeline_mode = #tpu.pipeline_mode<synchronous>, transform_indices = @transform_4, window_bounds = array<i64: 1, 32>}, {pipeline_mode = #tpu.pipeline_mode<synchronous>, transform_indices = @transform_5, window_bounds = array<i64: 1, 32>}, {transform_indices = @transform_6, window_bounds = array<i64: 1, 8, 1>}, {pipeline_mode = #tpu.pipeline_mode<synchronous>, transform_indices = @transform_7, window_bounds = array<i64: 8, 32>}]} {
    %c0_i32 = arith.constant 0 : i32
    %0 = arith.cmpi eq, %arg0, %c0_i32 : i32
    %1 = arith.extui %0 : i1 to i32
    %c0_i32_0 = arith.constant 0 : i32
    %2 = arith.cmpi ne, %1, %c0_i32_0 : i32
    scf.if %2 {
      %c0_23 = arith.constant 0 : index
      %c0_24 = arith.constant 0 : index
      %28 = vector.load %arg2[%c0_23, %c0_24] : memref<8x32xf32, #tpu.memory_space<vmem>>, vector<8x32xf32>
      %c0_25 = arith.constant 0 : index
      %c0_26 = arith.constant 0 : index
      %29 = vector.load %arg9[%c0_25, %c0_26] : memref<8x32xf32, #tpu.memory_space<vmem>>, vector<8x32xf32>
      tpu.vector_store %arg9[%c0_25, %c0_26], %28 {strides = array<i32>} : memref<8x32xf32, #tpu.memory_space<vmem>>, vector<8x32xf32>,
    } else {
    }
    %c0 = arith.constant 0 : index
    %c0_1 = arith.constant 0 : index
    %3 = vector.load %arg9[%c0, %c0_1] : memref<8x32xf32, #tpu.memory_space<vmem>>, vector<8x32xf32>
    %c0_2 = arith.constant 0 : index
    %c0_3 = arith.constant 0 : index
    %c0_4 = arith.constant 0 : index
    %4 = vector.load %arg1[%c0_2, %c0_3, %c0_4] : memref<1x8x16xf32, #tpu.memory_space<vmem>>, vector<1x8x16xf32>
    %5 = vector.shape_cast %4 : vector<1x8x16xf32> to vector<8x16xf32>
    %c0_5 = arith.constant 0 : index
    %c0_6 = arith.constant 0 : index
    %6 = vector.load %arg3[%c0_5, %c0_6] : memref<16x32xf32, #tpu.memory_space<vmem>>, vector<16x32xf32>
    %cst = arith.constant dense<0.000000e+00> : vector<8x32xf32>
    %7 = tpu.matmul %5, %6, %cst {dimension_numbers = #tpu.dot_dimension_numbers<[1], [0], [0], [1], [0, 0, 1, 1], [], []>} : vector<8x16xf32>, vector<16x32xf32>, vector<8x32xf32> -> vector<8x32xf32>
    %c0_7 = arith.constant 0 : index
    %c0_8 = arith.constant 0 : index
    %8 = vector.load %arg4[%c0_7, %c0_8] : memref<32x32xf32, #tpu.memory_space<vmem>>, vector<32x32xf32>
    %cst_9 = arith.constant dense<0.000000e+00> : vector<8x32xf32>
    %9 = tpu.matmul %3, %8, %cst_9 {dimension_numbers = #tpu.dot_dimension_numbers<[1], [0], [0], [1], [0, 0, 1, 1], [], []>} : vector<8x32xf32>, vector<32x32xf32>, vector<8x32xf32> -> vector<8x32xf32>
    %10 = arith.addf %7, %9 : vector<8x32xf32>
    %c0_10 = arith.constant 0 : index
    %c0_11 = arith.constant 0 : index
    %11 = vector.load %arg5[%c0_10, %c0_11] : memref<1x32xf32, #tpu.memory_space<vmem>>, vector<1x32xf32>
    %12 = vector.broadcast %11 : vector<1x32xf32> to vector<8x32xf32>
    %13 = arith.addf %10, %12 : vector<8x32xf32>
    %cst_12 = arith.constant 0.000000e+00 : f32
    %14 = vector.broadcast %cst_12 : f32 to vector<8x32xf32>
    %15 = arith.maximumf %13, %14 : vector<8x32xf32>
    %c0_13 = arith.constant 0 : index
    %c0_14 = arith.constant 0 : index
    %16 = vector.load %arg9[%c0_13, %c0_14] : memref<8x32xf32, #tpu.memory_space<vmem>>, vector<8x32xf32>
    tpu.vector_store %arg9[%c0_13, %c0_14], %15 {strides = array<i32>} : memref<8x32xf32, #tpu.memory_space<vmem>>, vector<8x32xf32>,
    %c0_15 = arith.constant 0 : index
    %c0_16 = arith.constant 0 : index
    %17 = vector.load %arg6[%c0_15, %c0_16] : memref<1x32xf32, #tpu.memory_space<vmem>>, vector<1x32xf32>
    %18 = vector.broadcast %17 : vector<1x32xf32> to vector<8x32xf32>
    %19 = arith.mulf %15, %18 : vector<8x32xf32>
    %cst_17 = arith.constant dense<0.000000e+00> : vector<8xf32>
    %20 = vector.multi_reduction <add>, %19, %cst_17 [1] : vector<8x32xf32> to vector<8xf32>
    %21 = vector.shape_cast %20 : vector<8xf32> to vector<8x1xf32>
    %c0_18 = arith.constant 0 : index
    %c0_19 = arith.constant 0 : index
    %c0_20 = arith.constant 0 : index
    %22 = vector.load %arg7[%c0_18, %c0_19, %c0_20] : memref<1x8x1xf32, #tpu.memory_space<vmem>>, vector<1x8x1xf32>
    %23 = vector.shape_cast %22 : vector<1x8x1xf32> to vector<8x1xf32>
    %24 = vector.shape_cast %21 : vector<8x1xf32> to vector<1x8x1xf32>
    tpu.vector_store %arg7[%c0_18, %c0_19, %c0_20], %24 {strides = array<i32>} : memref<1x8x1xf32, #tpu.memory_space<vmem>>, vector<1x8x1xf32>,
    %c0_i32_21 = arith.constant 0 : i32
    %25 = arith.cmpi eq, %arg0, %c0_i32_21 : i32
    %26 = arith.extui %25 : i1 to i32
    %c0_i32_22 = arith.constant 0 : i32
    %27 = arith.cmpi ne, %26, %c0_i32_22 : i32
    scf.if %27 {
      %c0_23 = arith.constant 0 : index
      %c0_24 = arith.constant 0 : index
      %28 = vector.load %arg8[%c0_23, %c0_24] : memref<8x32xf32, #tpu.memory_space<vmem>>, vector<8x32xf32>
      tpu.vector_store %arg8[%c0_23, %c0_24], %15 {strides = array<i32>} : memref<8x32xf32, #tpu.memory_space<vmem>>, vector<8x32xf32>,
    } else {
    }
    return
  }
  func.func @transform_0(%arg0: i32) -> (i32, i32, i32) {
    %c0_i32 = arith.constant 0 : i32
    %c0_i32_0 = arith.constant 0 : i32
    %c0_i32_1 = arith.constant 0 : i32
    return %arg0, %c0_i32, %c0_i32_0 : i32, i32, i32
  }
  func.func @transform_1(%arg0: i32) -> (i32, i32) {
    %c0_i32 = arith.constant 0 : i32
    %c0_i32_0 = arith.constant 0 : i32
    %c0_i32_1 = arith.constant 0 : i32
    return %c0_i32, %c0_i32_0 : i32, i32
  }
  func.func @transform_2(%arg0: i32) -> (i32, i32) {
    %c0_i32 = arith.constant 0 : i32
    %c0_i32_0 = arith.constant 0 : i32
    %c0_i32_1 = arith.constant 0 : i32
    return %c0_i32, %c0_i32_0 : i32, i32
  }
  func.func @transform_3(%arg0: i32) -> (i32, i32) {
    %c0_i32 = arith.constant 0 : i32
    %c0_i32_0 = arith.constant 0 : i32
    %c0_i32_1 = arith.constant 0 : i32
    return %c0_i32, %c0_i32_0 : i32, i32
  }
  func.func @transform_4(%arg0: i32) -> (i32, i32) {
    %c0_i32 = arith.constant 0 : i32
    %c0_i32_0 = arith.constant 0 : i32
    %c0_i32_1 = arith.constant 0 : i32
    return %c0_i32, %c0_i32_0 : i32, i32
  }
  func.func @transform_5(%arg0: i32) -> (i32, i32) {
    %c0_i32 = arith.constant 0 : i32
    %c0_i32_0 = arith.constant 0 : i32
    %c0_i32_1 = arith.constant 0 : i32
    return %c0_i32, %c0_i32_0 : i32, i32
  }
  func.func @transform_6(%arg0: i32) -> (i32, i32, i32) {
    %c0_i32 = arith.constant 0 : i32
    %c0_i32_0 = arith.constant 0 : i32
    %c0_i32_1 = arith.constant 0 : i32
    return %arg0, %c0_i32, %c0_i32_0 : i32, i32, i32
  }
  func.func @transform_7(%arg0: i32) -> (i32, i32) {
    %c0_i32 = arith.constant 0 : i32
    %c0_i32_0 = arith.constant 0 : i32
    %c0_i32_1 = arith.constant 0 : i32
    return %c0_i32, %c0_i32_0 : i32, i32
  }
}

</mosaic_0001>

<llo_original>
// kernel: rnn_cell_forward.1
$region0: #{rnn_cell_forward.1}
  #allocation0 [shape = 'u32[]', space=smem, size = 0x4, offset = 0x4, fixed_abs, tag = 'smem constant byte address 0x4 - core index']
  #allocation1 [shape = 'u32[144,128]{1,0:T(1,128)}', space=vmem, size = 0x12000, scoped, tag = 'internal scratch']
  #allocation2 [shape = 'f32[8,32]{1,0:T(8,128)}', space=vmem, size = 0x1000, scoped, tag = 'scratch operand']
  %s0 = inlined_call_operand.vmem [shape: f32[1,8,16], index: 0, kind: input, shape index: {}]
  %s1 = inlined_call_operand.vmem [shape: f32[8,32], index: 1, kind: input, shape index: {}, may-alias: {1,7}]
  %s2 = inlined_call_operand.vmem [shape: f32[16,32], index: 2, kind: input, shape index: {}]
  %s3 = inlined_call_operand.vmem [shape: f32[32,32], index: 3, kind: input, shape index: {}]
  %s4 = inlined_call_operand.vmem [shape: f32[1,32], index: 4, kind: input, shape index: {}]
  %s5 = inlined_call_operand.vmem [shape: f32[1,32], index: 5, kind: input, shape index: {}]
  %s6 = inlined_call_operand.vmem [shape: f32[1,8,1], index: 6, kind: output, shape index: {0}]
  %s7 = inlined_call_operand.vmem [shape: f32[8,32], index: 7, kind: output, shape index: {1}, may-alias: {1,7}]
  %8 = xla_tuple %s6, %s7
  %s9 = sld [smem:[#allocation0]]
  $region50: #{rnn_cell_forward.1} parent=0
    _
  %s11 = ssub.s32 1, %s9
  %s12 = scalar_select 0, %s11, %s9
  // Predicated region
  $region2: #{rnn_cell_forward.1} parent=0 // pred_check
    _
  $region3: #{rnn_cell_forward.1} parent=0 // pred_check_branch
    %14 = sbr.rel (0) target = $region5
  $region4: #{rnn_cell_forward.1} parent=0 // pred_region
    _
  $region5: #{rnn_cell_forward.1} parent=0 // pred_fallthru
    _
  // Predicated region
  $region6: #{rnn_cell_forward.1} parent=0 // pred_check
    _
  $region7: #{rnn_cell_forward.1} parent=0 // pred_check_branch
    %16 = sbr.rel (0) target = $region9
  $region8: #{rnn_cell_forward.1} parent=0 // pred_region
    _
  $region9: #{rnn_cell_forward.1} parent=0 // pred_fallthru
    _
  // Predicated region
  $region10: #{rnn_cell_forward.1} parent=0 // pred_check
    _
  $region11: #{rnn_cell_forward.1} parent=0 // pred_check_branch
    %18 = sbr.rel (0) target = $region13
  $region12: #{rnn_cell_forward.1} parent=0 // pred_region
    _
  $region13: #{rnn_cell_forward.1} parent=0 // pred_fallthru
    _
  // Predicated region
  $region14: #{rnn_cell_forward.1} parent=0 // pred_check
    _
  $region15: #{rnn_cell_forward.1} parent=0 // pred_check_branch
    %20 = sbr.rel (0) target = $region17
  $region16: #{rnn_cell_forward.1} parent=0 // pred_region
    _
  $region17: #{rnn_cell_forward.1} parent=0 // pred_fallthru
    _
  // Predicated region
  $region18: #{rnn_cell_forward.1} parent=0 // pred_check
    _
  $region19: #{rnn_cell_forward.1} parent=0 // pred_check_branch
    %22 = sbr.rel (0) target = $region21
  $region20: #{rnn_cell_forward.1} parent=0 // pred_region
    _
  $region21: #{rnn_cell_forward.1} parent=0 // pred_fallthru
    _
  // Predicated region
  $region22: #{rnn_cell_forward.1} parent=0 // pred_check
    _
  $region23: #{rnn_cell_forward.1} parent=0 // pred_check_branch
    %24 = sbr.rel (0) target = $region25
  $region24: #{rnn_cell_forward.1} parent=0 // pred_region
    _
  $region25: #{rnn_cell_forward.1} parent=0 // pred_fallthru
    _
  %p25 = scmp.eq.s32.totalorder 0, 0
  // Predicated region
  $region26: #{rnn_cell_forward.1} parent=0 // pred_check
    %p26 = pneg %p25
  $region27: #{rnn_cell_forward.1} parent=0 // pred_check_branch
    %28 = sbr.rel (%p26) target = $region29
  $region28: #{rnn_cell_forward.1} parent=0 // pred_region
    %v29 = vld [vmem:[%s1] sm:$0xff]
    %vm30 = vcmask 261120
    %31 = vst.msk [vmem:[#allocation2] sm:$0xff] %vm30, %v29
  $region29: #{rnn_cell_forward.1} parent=0 // pred_fallthru
    _
  %v32 = vld [vmem:[#allocation2] sm:$0xff]
  %v33 = vld [vmem:[%s0] sm:$0xff]
  %v34 = vld [vmem:[%s2] sm:$0xff]
  %v35 = vld [vmem:[%s2 + $0x8] sm:$0xff]
  %v36 = vld [vmem:[%s3] sm:$0xff]
  %v37 = vld [vmem:[%s3 + $0x8] sm:$0xff]
  %v38 = vld [vmem:[%s3 + $0x10] sm:$0xff]
  %v39 = vld [vmem:[%s3 + $0x18] sm:$0xff]
  %vm40 = vcmask 261120
  %v42 = vsel %vm40, %v32, 0
  %44 = vmatprep.subr.mxu0 0.0
  %45 = vmatpush1.msra.mxu0 %v36
  %46 = vmatprep.subr.mxu0 0.0
  %47 = vmatpush1.msra.mxu0 %v37
  %48 = vmatprep.subr.mxu0 0.0
  %49 = vmatpush1.msra.mxu0 %v38
  %50 = vmatprep.subr.mxu0 0.0
  %51 = vmatpush1.msra.mxu0 %v39
  %52 = vmatprep.subr.mxu0 0.0
  %53 = vmatpush1.msra.mxu0 0.0
  %54 = vmatprep.subr.mxu0 0.0
  %55 = vmatpush1.msra.mxu0 0.0
  %56 = vmatprep.subr.mxu0 0.0
  %57 = vmatpush1.msra.mxu0 0.0
  %58 = vmatprep.subr.mxu0 0.0
  %59 = vmatpush1.msra.mxu0 0.0
  %60 = vmatprep.subr.mxu0 0.0
  %61 = vmatpush1.msra.mxu0 0.0
  %62 = vmatprep.subr.mxu0 0.0
  %63 = vmatpush1.msra.mxu0 0.0
  %64 = vmatprep.subr.mxu0 0.0
  %65 = vmatpush1.msra.mxu0 0.0
  %66 = vmatprep.subr.mxu0 0.0
  %67 = vmatpush1.msra.mxu0 0.0
  %68 = vmatprep.subr.mxu0 0.0
  %69 = vmatpush1.msra.mxu0 0.0
  %70 = vmatprep.subr.mxu0 0.0
  %71 = vmatpush1.msra.mxu0 0.0
  %72 = vmatprep.subr.mxu0 0.0
  %73 = vmatpush1.msra.mxu0 0.0
  %74 = vmatprep.subr.mxu0 0.0
  %75 = vmatpush1.msra.mxu0 0.0
  %76 = vmatprep.subr.mxu0 0.0
  %77 = vmatpush1.msra.mxu0 0.0
  %78 = vmatprep.subr.mxu0 0.0
  %79 = vmatpush1.msra.mxu0 0.0
  %80 = vmatprep.subr.mxu0 0.0
  %81 = vmatpush1.msra.mxu0 0.0
  %82 = vmatprep.subr.mxu0 0.0
  %83 = vmatpush1.msra.mxu0 0.0
  %84 = vmatprep.subr.mxu0 0.0
  %85 = vmatpush1.msra.mxu0 0.0
  %86 = vmatprep.subr.mxu0 0.0
  %87 = vmatpush1.msra.mxu0 0.0
  %88 = vmatprep.subr.mxu0 0.0
  %89 = vmatpush1.msra.mxu0 0.0
  %90 = vmatprep.subr.mxu0 0.0
  %91 = vmatpush1.msra.mxu0 0.0
  %92 = vmatprep.subr.mxu0 0.0
  %93 = vmatpush1.msra.mxu0 0.0
  %94 = vmatprep.subr.mxu0 0.0
  %95 = vmatpush1.msra.mxu0 0.0
  %96 = vmatprep.subr.mxu0 0.0
  %97 = vmatpush1.msra.mxu0 0.0
  %98 = vmatprep.subr.mxu0 0.0
  %99 = vmatpush1.msra.mxu0 0.0
  %100 = vmatprep.subr.mxu0 0.0
  %101 = vmatpush1.msra.mxu0 0.0
  %102 = vmatprep.subr.mxu0 0.0
  %103 = vmatpush1.msra.mxu0 0.0
  %104 = vmatprep.subr.mxu0 0.0
  %105 = vmatpush1.msra.mxu0 0.0
  %106 = vmatprep.subr.mxu0 0.0
  %107 = vmatpush1.msra.mxu0 0.0
  %108 = vmatprep.mubr.f32.mxu0 0.0
  %109 = vmatmul.mubr.f32.gmra.mrb[0].mxu0 %v42
  %v110 = vpop.f32.mrb[0].mxu0
  %v111 = vadd.f32 0.0, %v110
  %v112 = vpop.f32.mrb[0].mxu0
  %113 = vdwg.mxu0
  %vm114 = vcmask 130048
  %v116 = vsel %vm114, %v33, 0
  %118 = vmatprep.subr.mxu0 0.0
  %119 = vmatpush1.msra.mxu0 %v34
  %120 = vmatprep.subr.mxu0 0.0
  %121 = vmatpush1.msra.mxu0 %v35
  %122 = vmatprep.subr.mxu0 0.0
  %123 = vmatpush1.msra.mxu0 0.0
  %124 = vmatprep.subr.mxu0 0.0
  %125 = vmatpush1.msra.mxu0 0.0
  %126 = vmatprep.subr.mxu0 0.0
  %127 = vmatpush1.msra.mxu0 0.0
  %128 = vmatprep.subr.mxu0 0.0
  %129 = vmatpush1.msra.mxu0 0.0
  %130 = vmatprep.subr.mxu0 0.0
  %131 = vmatpush1.msra.mxu0 0.0
  %132 = vmatprep.subr.mxu0 0.0
  %133 = vmatpush1.msra.mxu0 0.0
  %134 = vmatprep.subr.mxu0 0.0
  %135 = vmatpush1.msra.mxu0 0.0
  %136 = vmatprep.subr.mxu0 0.0
  %137 = vmatpush1.msra.mxu0 0.0
  %138 = vmatprep.subr.mxu0 0.0
  %139 = vmatpush1.msra.mxu0 0.0
  %140 = vmatprep.subr.mxu0 0.0
  %141 = vmatpush1.msra.mxu0 0.0
  %142 = vmatprep.subr.mxu0 0.0
  %143 = vmatpush1.msra.mxu0 0.0
  %144 = vmatprep.subr.mxu0 0.0
  %145 = vmatpush1.msra.mxu0 0.0
  %146 = vmatprep.subr.mxu0 0.0
  %147 = vmatpush1.msra.mxu0 0.0
  %148 = vmatprep.subr.mxu0 0.0
  %149 = vmatpush1.msra.mxu0 0.0
  %150 = vmatprep.subr.mxu0 0.0
  %151 = vmatpush1.msra.mxu0 0.0
  %152 = vmatprep.subr.mxu0 0.0
  %153 = vmatpush1.msra.mxu0 0.0
  %154 = vmatprep.subr.mxu0 0.0
  %155 = vmatpush1.msra.mxu0 0.0
  %156 = vmatprep.subr.mxu0 0.0
  %157 = vmatpush1.msra.mxu0 0.0
  %158 = vmatprep.subr.mxu0 0.0
  %159 = vmatpush1.msra.mxu0 0.0
  %160 = vmatprep.subr.mxu0 0.0
  %161 = vmatpush1.msra.mxu0 0.0
  %162 = vmatprep.subr.mxu0 0.0
  %163 = vmatpush1.msra.mxu0 0.0
  %164 = vmatprep.subr.mxu0 0.0
  %165 = vmatpush1.msra.mxu0 0.0
  %166 = vmatprep.subr.mxu0 0.0
  %167 = vmatpush1.msra.mxu0 0.0
  %168 = vmatprep.subr.mxu0 0.0
  %169 = vmatpush1.msra.mxu0 0.0
  %170 = vmatprep.subr.mxu0 0.0
  %171 = vmatpush1.msra.mxu0 0.0
  %172 = vmatprep.subr.mxu0 0.0
  %173 = vmatpush1.msra.mxu0 0.0
  %174 = vmatprep.subr.mxu0 0.0
  %175 = vmatpush1.msra.mxu0 0.0
  %176 = vmatprep.subr.mxu0 0.0
  %177 = vmatpush1.msra.mxu0 0.0
  %178 = vmatprep.subr.mxu0 0.0
  %179 = vmatpush1.msra.mxu0 0.0
  %180 = vmatprep.subr.mxu0 0.0
  %181 = vmatpush1.msra.mxu0 0.0
  %182 = vmatprep.mubr.f32.mxu0 0.0
  %183 = vmatmul.mubr.f32.gmra.mrb[0].mxu0 %v116
  %v184 = vpop.f32.mrb[0].mxu0
  %v185 = vadd.f32 %v111, %v184
  %v186 = vpop.f32.mrb[0].mxu0
  %187 = vdwg.mxu0
  %v188 = vld [vmem:[%s4] sm:$0x1]
  %v190 = vlaneseq
  %v191 = vshrl.u32 %v190, 7
  %v192 = vsub.s32 0, %v191
  %v193 = vrot.slane %v188, %v192
  %v195 = vadd.f32 %v185, %v193
  %v196 = vmax.f32 %v195, 0.0
  %197 = vst.msk [vmem:[#allocation2] sm:$0xff] %vm40, %v196
  %v198 = vld [vmem:[%s5] sm:$0x1]
  %v200 = vlaneseq
  %v201 = vshrl.u32 %v200, 7
  %v202 = vsub.s32 0, %v201
  %v203 = vrot.slane %v198, %v202
  %v205 = vmul.f32 %v196, %v203
  %v206 = vsel %vm40, %v205, 0.0
  %207 = vadd.xlane.f32.xlu0 %v206
  %v208 = vpop.xlane.xlu0 %207
  %vm209 = vcmask 7168
  %210 = vst.msk [vmem:[%s6] sm:$0xff] %vm209, %v208
  // Predicated region
  $region30: #{rnn_cell_forward.1} parent=0 // pred_check
    %p211 = pneg %p25
  $region31: #{rnn_cell_forward.1} parent=0 // pred_check_branch
    %213 = sbr.rel (%p211) target = $region33
  $region32: #{rnn_cell_forward.1} parent=0 // pred_region
    %214 = vst.msk [vmem:[%s7] sm:$0xff] %vm40, %v196
  $region33: #{rnn_cell_forward.1} parent=0 // pred_fallthru
    _
  // Predicated region
  $region34: #{rnn_cell_forward.1} parent=0 // pred_check
    _
  $region35: #{rnn_cell_forward.1} parent=0 // pred_check_branch
    %216 = sbr.rel (0) target = $region37
  $region36: #{rnn_cell_forward.1} parent=0 // pred_region
    _
  $region37: #{rnn_cell_forward.1} parent=0 // pred_fallthru
    _
  // Predicated region
  $region38: #{rnn_cell_forward.1} parent=0 // pred_check
    _
  $region39: #{rnn_cell_forward.1} parent=0 // pred_check_branch
    %218 = sbr.rel (0) target = $region41
  $region40: #{rnn_cell_forward.1} parent=0 // pred_region
    _
  $region41: #{rnn_cell_forward.1} parent=0 // pred_fallthru
    _
  // Predicated region
  $region42: #{rnn_cell_forward.1} parent=0 // pred_check
    _
  $region43: #{rnn_cell_forward.1} parent=0 // pred_check_branch
    %220 = sbr.rel (0) target = $region45
  $region44: #{rnn_cell_forward.1} parent=0 // pred_region
    _
  $region45: #{rnn_cell_forward.1} parent=0 // pred_fallthru
    _
  // Predicated region
  $region46: #{rnn_cell_forward.1} parent=0 // pred_check
    _
  $region47: #{rnn_cell_forward.1} parent=0 // pred_check_branch
    %222 = sbr.rel (0) target = $region49
  $region48: #{rnn_cell_forward.1} parent=0 // pred_region
    _
  $region49: #{rnn_cell_forward.1} parent=0 // pred_fallthru
    _

</llo_original>
